<compile_context>
chip_gen: v5e
topology: v5e:2x2
jax: 0.10.0
libtpu: 0.0.40
codegen_flags: <defaults>
</compile_context>

<pallas_src>
import jax
import jax.numpy as jnp
from jax.experimental import pallas as pl
from jax.experimental.pallas import tpu as pltpu

TARGET_BLOCK_BYTES = 1 << 20   # ~1 MiB per buffer (perf review: 1024-2048 rows x 128 lanes)
LANE_CHOICES = (1024, 512, 256, 128)


def affine_kernel(w_ref, b_ref, x_ref, o_ref):
    # y = x * w + b   -- pure VPU work; w/b are SMEM scalars.
    # (Parameters are f32; compute happens in the promoted dtype and is cast
    #  back to the output dtype, so a bf16 x would compute in f32 and downcast.)
    o_ref[...] = (x_ref[...] * w_ref[0] + b_ref[0]).astype(o_ref.dtype)


def _round_up(a, m):
    return ((a + m - 1) // m) * m


def linear_pallas(x, w, b):
    """x: [N, 1], w: [1, 1], b: [1]  ->  [N, 1]   (nn.Linear(1, 1) forward)."""
    N, F_in = x.shape
    F_out = w.shape[0]
    assert F_in == 1 and F_out == 1, "kernel is specialized for Linear(1, 1)"

    # Scalar parameters live in SMEM (32-bit, SMEM-friendly).
    w_s = w.reshape(1).astype(jnp.float32)
    b_s = b.reshape(1).astype(jnp.float32)
    smem_spec = pl.BlockSpec(memory_space=pltpu.MemorySpace.SMEM)
    itemsize = x.dtype.itemsize

    if N >= 128 and N % 128 == 0:
        # ---- lane-dense fast path: free (copy-less) reshape, no pad, no slice ----
        lane_w = next(l for l in LANE_CHOICES if N % l == 0)
        rows = N // lane_w
        x2 = x.reshape(rows, lane_w)            # metadata-only reshape

        # Largest block <= ~1 MiB per buffer, sublane dim a multiple of 8.
        max_tile_rows = max(8, (TARGET_BLOCK_BYTES // (lane_w * itemsize)) // 8 * 8)
        tile_rows = min(max_tile_rows, _round_up(rows, 8))
        n_tiles = pl.cdiv(rows, tile_rows)
        # Keep >= 2 tiles when there is enough work so v7x's 2 TensorCores both
        # get a share of the "parallel" axis (negligible cost on v5e/v6e).
        if n_tiles == 1 and rows >= 16:
            tile_rows = _round_up(pl.cdiv(rows, 2), 8)
            n_tiles = pl.cdiv(rows, tile_rows)

        y2 = pl.pallas_call(
            affine_kernel,
            out_shape=jax.ShapeDtypeStruct((rows, lane_w), x.dtype),
            grid=(n_tiles,),
            in_specs=[
                smem_spec,                                            # w scalar
                smem_spec,                                            # b scalar
                pl.BlockSpec((tile_rows, lane_w), lambda i: (i, 0)),  # x tile (lane-dense)
            ],
            out_specs=pl.BlockSpec((tile_rows, lane_w), lambda i: (i, 0)),
            compiler_params=pltpu.CompilerParams(
                dimension_semantics=("parallel",),
            ),
        )(w_s, b_s, x2)
        return y2.reshape(N, F_out)             # metadata-only reshape (rows*lane_w == N)

    # ---- ragged / tiny-N path: operate on the native (N, 1) layout, no copies ----
    # For small N (the spec uses N=4) a single whole-array block is used; very
    # large ragged N streams in (8192, 1) blocks (correct, just narrower stores).
    # TODO(synk): a large ragged N could be split into a lane-dense main chunk
    # plus a tiny tail for full bandwidth; not needed at the spec's sizes.
    tile_n = N if N <= 8192 else 8192
    n_tiles = pl.cdiv(N, tile_n)
    y = pl.pallas_call(
        affine_kernel,
        out_shape=jax.ShapeDtypeStruct((N, F_out), x.dtype),
        grid=(n_tiles,),
        in_specs=[
            smem_spec,
            smem_spec,
            pl.BlockSpec((tile_n, F_in), lambda i: (i, 0)),
        ],
        out_specs=pl.BlockSpec((tile_n, F_out), lambda i: (i, 0)),
        compiler_params=pltpu.CompilerParams(
            dimension_semantics=("parallel",),
        ),
    )(w_s, b_s, x)
    return y


if __name__ == "__main__":
    # Deterministic parameter init (shapes from nn.Linear(1, 1)):
    #   weight: [1, 1], bias: [1], PyTorch-style U(-1/sqrt(fan_in), 1/sqrt(fan_in)).
    key = jax.random.PRNGKey(0)
    kw, kb = jax.random.split(key)
    bound = 1.0  # 1/sqrt(fan_in) with fan_in = 1
    w = jax.random.uniform(kw, (1, 1), jnp.float32, -bound, bound)
    b = jax.random.uniform(kb, (1,), jnp.float32, -bound, bound)

    # Input matching the original script: [1, 2, 3, 4] as 4 samples x 1 feature.
    x = jnp.array([1.0, 2.0, 3.0, 4.0], dtype=jnp.float32).reshape(4, 1)
    y = linear_pallas(x, w, b)
    jax.block_until_ready(y)
    y_ref = x @ w.T + b.reshape(1, -1)
    assert y.shape == (4, 1) and y.dtype == jnp.float32
    assert jnp.allclose(y, y_ref, atol=1e-6, rtol=1e-6)

    # Also exercise the lane-dense fast path (multiple-of-128 batches), including
    # a partial-row block (384 -> 3x128), a single partial tile (1024 -> 1x1024)
    # and a multi-tile grid (262144 -> 2 tiles of 128x1024).
    for n in (384, 1024, 262144):
        xs = jax.random.normal(jax.random.PRNGKey(n), (n, 1), dtype=jnp.float32)
        ys = linear_pallas(xs, w, b)
        jax.block_until_ready(ys)
        ys_ref = xs @ w.T + b.reshape(1, -1)
        assert ys.shape == (n, 1)
        assert jnp.allclose(ys, ys_ref, atol=1e-5, rtol=1e-5)

    print("KERNEL_OK")
</pallas_src>

<mosaic_0001>
module attributes {stable_mosaic.version = 11 : i64} {
  func.func @affine_kernel(%arg0: i32, %arg1: memref<1xf32, #tpu.memory_space<smem>>, %arg2: memref<1xf32, #tpu.memory_space<smem>>, %arg3: memref<4x1xf32, #tpu.memory_space<vmem>>, %arg4: memref<4x1xf32, #tpu.memory_space<vmem>>) attributes {dimension_semantics = [#tpu.dimension_semantics<parallel>], iteration_bounds = array<i64: 1>, scalar_prefetch = 0 : i64, scratch_operands = 0 : i64, tpu.core_type = #tpu.core_type<tc>, window_params = [{transform_indices = @transform_0, window_bounds = array<i64: 1>}, {transform_indices = @transform_1, window_bounds = array<i64: 1>}, {transform_indices = @transform_2, window_bounds = array<i64: 4, 1>}, {transform_indices = @transform_3, window_bounds = array<i64: 4, 1>}]} {
    %c0 = arith.constant 0 : index
    %c0_0 = arith.constant 0 : index
    %0 = vector.load %arg3[%c0, %c0_0] : memref<4x1xf32, #tpu.memory_space<vmem>>, vector<4x1xf32>
    %c0_1 = arith.constant 0 : index
    %1 = memref.load %arg1[%c0_1] : memref<1xf32, #tpu.memory_space<smem>>
    %2 = vector.broadcast %1 : f32 to vector<4x1xf32>
    %3 = arith.mulf %0, %2 : vector<4x1xf32>
    %c0_2 = arith.constant 0 : index
    %4 = memref.load %arg2[%c0_2] : memref<1xf32, #tpu.memory_space<smem>>
    %5 = vector.broadcast %4 : f32 to vector<4x1xf32>
    %6 = arith.addf %3, %5 : vector<4x1xf32>
    %c0_3 = arith.constant 0 : index
    %c0_4 = arith.constant 0 : index
    %7 = vector.load %arg4[%c0_3, %c0_4] : memref<4x1xf32, #tpu.memory_space<vmem>>, vector<4x1xf32>
    tpu.vector_store %arg4[%c0_3, %c0_4], %6 {strides = array<i32>} : memref<4x1xf32, #tpu.memory_space<vmem>>, vector<4x1xf32>,
    return
  }
  func.func @transform_0(%arg0: i32) -> i32 {
    %c0_i32 = arith.constant 0 : i32
    %c0_i32_0 = arith.constant 0 : i32
    return %c0_i32 : i32
  }
  func.func @transform_1(%arg0: i32) -> i32 {
    %c0_i32 = arith.constant 0 : i32
    %c0_i32_0 = arith.constant 0 : i32
    return %c0_i32 : i32
  }
  func.func @transform_2(%arg0: i32) -> (i32, i32) {
    %c0_i32 = arith.constant 0 : i32
    %c0_i32_0 = arith.constant 0 : i32
    return %arg0, %c0_i32 : i32, i32
  }
  func.func @transform_3(%arg0: i32) -> (i32, i32) {
    %c0_i32 = arith.constant 0 : i32
    %c0_i32_0 = arith.constant 0 : i32
    return %arg0, %c0_i32 : i32, i32
  }
}

</mosaic_0001>

<llo_original>
// kernel: tpu_custom_call.1
$region0: #{tpu_custom_call.1}
  #allocation0 [shape = 'u32[]', space=smem, size = 0x4, offset = 0x4, fixed_abs, tag = 'smem constant byte address 0x4 - core index']
  #allocation1 [shape = 'u32[72,128]{1,0:T(1,128)}', space=vmem, size = 0x9000, scoped, tag = 'internal scratch']
  #allocation2 [shape = 'f32[1]{0:T(128)S(6)}', space=smem, size = 0x200, scoped, tag = 'scoped memory for tpu_custom_call.1']
  #allocation3 [shape = 'f32[1]{0:T(128)S(6)}', space=smem, size = 0x200, scoped, tag = 'scoped memory for tpu_custom_call.1']
  %s0 = inlined_call_operand.<no memory space> [shape: f32[1], index: 0, kind: input, shape index: {}]
  %s1 = inlined_call_operand.<no memory space> [shape: f32[1], index: 1, kind: input, shape index: {}]
  %s2 = inlined_call_operand.vmem [shape: f32[4,1], index: 2, kind: input, shape index: {}]
  %s3 = inlined_call_operand.vmem [shape: f32[4,1], index: 3, kind: output, shape index: {}]
  %s4 = sld [smem:[#allocation0]]
  $region22: #{tpu_custom_call.1} parent=0
    _
  %s6 = ssub.s32 1, %s4
  %s7 = scalar_select 0, %s6, %s4
  %8 = sst [smem:[#allocation2]] %s0
  %9 = sst [smem:[#allocation3]] %s1
  // Predicated region
  $region2: #{tpu_custom_call.1} parent=0 // pred_check
    _
  $region3: #{tpu_custom_call.1} parent=0 // pred_check_branch
    %11 = sbr.rel (0) target = $region5
  $region4: #{tpu_custom_call.1} parent=0 // pred_region
    _
  $region5: #{tpu_custom_call.1} parent=0 // pred_fallthru
    _
  // Predicated region
  $region6: #{tpu_custom_call.1} parent=0 // pred_check
    _
  $region7: #{tpu_custom_call.1} parent=0 // pred_check_branch
    %13 = sbr.rel (0) target = $region9
  $region8: #{tpu_custom_call.1} parent=0 // pred_region
    _
  $region9: #{tpu_custom_call.1} parent=0 // pred_fallthru
    _
  // Predicated region
  $region10: #{tpu_custom_call.1} parent=0 // pred_check
    _
  $region11: #{tpu_custom_call.1} parent=0 // pred_check_branch
    %15 = sbr.rel (0) target = $region13
  $region12: #{tpu_custom_call.1} parent=0 // pred_region
    _
  $region13: #{tpu_custom_call.1} parent=0 // pred_fallthru
    _
  %v16 = vld [vmem:[%s2] sm:$0xf]
  %s17 = sld [smem:[#allocation2]]
  %v18 = vstv %s17
  %v19 = vmul.f32 %v16, %v18
  %s20 = sld [smem:[#allocation3]]
  %v21 = vstv %s20
  %v22 = vadd.f32 %v19, %v21
  %vm23 = vcmask 3072
  %24 = vst.msk [vmem:[%s3] sm:$0xf] %vm23, %v22
  // Predicated region
  $region14: #{tpu_custom_call.1} parent=0 // pred_check
    _
  $region15: #{tpu_custom_call.1} parent=0 // pred_check_branch
    %26 = sbr.rel (0) target = $region17
  $region16: #{tpu_custom_call.1} parent=0 // pred_region
    _
  $region17: #{tpu_custom_call.1} parent=0 // pred_fallthru
    _
  // Predicated region
  $region18: #{tpu_custom_call.1} parent=0 // pred_check
    _
  $region19: #{tpu_custom_call.1} parent=0 // pred_check_branch
    %28 = sbr.rel (0) target = $region21
  $region20: #{tpu_custom_call.1} parent=0 // pred_region
    _
  $region21: #{tpu_custom_call.1} parent=0 // pred_fallthru
    _

</llo_original>
